<compile_context>
chip_gen: v7x
topology: tpu7x:2x2x1
jax: 0.10.0
libtpu: 0.0.40
codegen_flags: <defaults>
</compile_context>

<pallas_src>
import math
import jax
import jax.numpy as jnp
from jax.experimental import pallas as pl
from jax.experimental.pallas import tpu as pltpu


def _round_up(x, m):
    return ((x + m - 1) // m) * m


def _vmem_capacity_bytes():
    try:
        info = pltpu.get_tpu_info()
        cap = getattr(info, "vmem_capacity_bytes", None)
        if cap:
            return int(cap)
    except Exception:
        pass
    return 64 << 20          # conservative fallback (v7x physical VMEM)


# ---------------------------------------------------------------------------
# Pallas kernel: one (tm, tn) output tile, accumulated over the K grid axis.
#   o = SiLU( patches @ (W * bn_scale) + bn_shift )
# ---------------------------------------------------------------------------
def _conv_bn_silu_kernel(p_ref, w_ref, shift_ref, o_ref, acc_ref):
    # p_ref:     (tm, tk)                       bf16 im2col patch tile
    # w_ref:     (tk, tn) streamed  OR  (K_pad, C2p) resident   bf16 weights
    # shift_ref: (1, tn)                        f32 folded BN shift
    # o_ref:     (tm, tn)                       bf16 output tile
    # acc_ref:   (tm, tn)                       f32 accumulator (resident over kk)
    kk = pl.program_id(2)
    tm, tk = p_ref.shape
    tn = acc_ref.shape[1]

    @pl.when(kk == 0)
    def _():
        acc_ref[...] = jnp.zeros_like(acc_ref)

    if w_ref.shape == (tk, tn):
        w = w_ref[...]                                   # streamed / exact-fit
    else:
        # weight fully resident in VMEM: slice this (kk, j) tile out of it
        j = pl.program_id(1)
        k0 = pl.multiple_of(kk * tk, tk)
        n0 = pl.multiple_of(j * tn, tn)
        w = w_ref[pl.ds(k0, tk), pl.ds(n0, tn)]

    acc_ref[...] += jnp.dot(p_ref[...], w, preferred_element_type=jnp.float32)

    @pl.when(kk == pl.num_programs(2) - 1)
    def _():
        y = acc_ref[...] + shift_ref[...]
        o_ref[...] = (y * jax.nn.sigmoid(y)).astype(o_ref.dtype)   # SiLU


def conv_bn_silu_pallas(x_nchw, weight, gamma, beta, run_mean, run_var,
                        *, k=1, s=1, p=0, eps=1e-5, tm=512):
    """x_nchw: (N, C1, H, W) float32.  weight: (C2, C1, k, k).  Returns NCHW f32."""
    N, C1, H, W = x_nchw.shape
    C2 = weight.shape[0]
    Ho = (H + 2 * p - k) // s + 1
    Wo = (W + 2 * p - k) // s + 1
    K = C1 * k * k
    M = N * Ho * Wo

    # ---- im2col patch matrix in bf16 (rows = N*Ho*Wo, cols = C1*k*k) --------
    x_bf16 = x_nchw.astype(jnp.bfloat16)
    if k == 1 and p == 0:
        # 1x1 conv: no im2col needed -- just a strided NHWC view of the input.
        x_s = x_bf16[:, :, ::s, ::s]
        patches = jnp.transpose(x_s, (0, 2, 3, 1)).reshape(M, K)
    else:
        # TODO(synk): for k>1 the im2col matrix is still materialized in HBM;
        # fusing the (kh,kw) shifts into the kernel K loop would remove the
        # k*k HBM expansion entirely.
        patches = jax.lax.conv_general_dilated_patches(
            x_bf16, filter_shape=(k, k), window_strides=(s, s),
            padding=[(p, p), (p, p)],
            dimension_numbers=("NCHW", "OIHW", "NCHW"))
        patches = jnp.transpose(patches, (0, 2, 3, 1)).reshape(M, K)

    # ---- fold BatchNorm (eval mode): scale into W, shift as bias ------------
    scale = gamma / jnp.sqrt(run_var + eps)                       # (C2,)
    shift = beta - run_mean * scale                               # (C2,)
    w_mat = weight.reshape(C2, K).T.astype(jnp.float32) * scale[None, :]  # (K, C2)

    # ---- tile planning -------------------------------------------------------
    C2p = _round_up(C2, 128)                 # lane-dense output columns
    K128 = _round_up(K, 128)
    if K128 <= 512:
        tk = K128
    else:                                    # minimize K padding waste
        best = None
        for cand in (512, 384, 256, 128):
            padded = _round_up(K128, cand)
            if best is None or padded < best[0] or (padded == best[0] and cand > best[1]):
                best = (padded, cand)
        tk = best[1]
    K_pad = _round_up(K128, tk)

    # output-channel tile (must divide C2p, multiple of 128)
    if C2p <= 1024:
        tn = C2p
    else:
        tn = 128
        for cand in (1024, 896, 768, 640, 512, 384, 256):
            if C2p % cand == 0:
                tn = cand
                break

    tm_eff = min(tm, _round_up(M, 8))
    # keep >= 2 parallel blocks so both v7x TensorCores get work
    if (C2p // tn) == 1 and _round_up(M, tm_eff) // tm_eff < 2 and M > 8:
        tm_eff = _round_up((M + 1) // 2, 8)

    phys_vmem = _vmem_capacity_bytes()

    def _budget(tm_b, resident):
        base = (2 * tm_b * tk * 2            # patch tiles (bf16, double-buffered)
                + 2 * tm_b * tn * 2          # output tiles (bf16)
                + tm_b * tn * 4              # accumulator scratch (f32)
                + 2 * 8 * tn * 4)            # shift (padded to 8 sublanes)
        wbytes = (2 * K_pad * C2p * 2) if resident else (2 * tk * tn * 2)
        return base + wbytes

    weight_resident = _budget(tm_eff, True) <= int(0.6 * phys_vmem)
    while _budget(tm_eff, weight_resident) > int(0.7 * phys_vmem) and tm_eff > 64:
        tm_eff = _round_up(tm_eff // 2, 8)

    M_pad = _round_up(M, tm_eff)

    patches = jnp.pad(patches, ((0, M_pad - M), (0, K_pad - K)))           # bf16
    w_mat = jnp.pad(w_mat, ((0, K_pad - K), (0, C2p - C2))).astype(jnp.bfloat16)
    shift_p = jnp.pad(shift.astype(jnp.float32), (0, C2p - C2)).reshape(1, C2p)

    grid = (M_pad // tm_eff, C2p // tn, K_pad // tk)

    if weight_resident:
        w_spec = pl.BlockSpec((K_pad, C2p), lambda i, j, kk: (0, 0))   # load once
    else:
        w_spec = pl.BlockSpec((tk, tn), lambda i, j, kk: (kk, j))      # stream

    vmem_limit = min(max(_budget(tm_eff, weight_resident) + (4 << 20), 32 << 20),
                     (phys_vmem * 3) // 4)

    out = pl.pallas_call(
        _conv_bn_silu_kernel,
        out_shape=jax.ShapeDtypeStruct((M_pad, C2p), jnp.bfloat16),
        grid_spec=pltpu.PrefetchScalarGridSpec(
            num_scalar_prefetch=0,
            grid=grid,
            in_specs=[
                pl.BlockSpec((tm_eff, tk), lambda i, j, kk: (i, kk)),
                w_spec,
                pl.BlockSpec((1, tn), lambda i, j, kk: (0, j)),
            ],
            out_specs=pl.BlockSpec((tm_eff, tn), lambda i, j, kk: (i, j)),
            scratch_shapes=[pltpu.VMEM((tm_eff, tn), jnp.float32)],
        ),
        compiler_params=pltpu.CompilerParams(
            dimension_semantics=("parallel", "parallel", "arbitrary"),
            vmem_limit_bytes=int(vmem_limit)),
    )(patches, w_mat, shift_p)

    # TODO(synk): an NHWC-consuming downstream kernel could take `out` directly
    # in bf16 and skip this transpose (a full extra HBM read+write of the output).
    out = out[:M, :C2].reshape(N, Ho, Wo, C2)
    return jnp.transpose(out, (0, 3, 1, 2)).astype(jnp.float32)       # NCHW f32


# ---------------------------------------------------------------------------
# Plain-JAX reference (same semantics) for a silent correctness check
# ---------------------------------------------------------------------------
def _reference(x, weight, gamma, beta, run_mean, run_var, *, k, s, p, eps=1e-5):
    y = jax.lax.conv_general_dilated(
        x, weight, window_strides=(s, s), padding=[(p, p), (p, p)],
        dimension_numbers=("NCHW", "OIHW", "NCHW"))
    g = gamma.reshape(1, -1, 1, 1)
    b = beta.reshape(1, -1, 1, 1)
    m = run_mean.reshape(1, -1, 1, 1)
    v = run_var.reshape(1, -1, 1, 1)
    y = (y - m) / jnp.sqrt(v + eps) * g + b
    return y * jax.nn.sigmoid(y)


def _make_params(key, C1, C2, k):
    kw, kg, kb, km, kv = jax.random.split(key, 5)
    fan_in = C1 * k * k
    bound = 1.0 / math.sqrt(fan_in)
    weight = jax.random.uniform(kw, (C2, C1, k, k), jnp.float32, -bound, bound)
    gamma = 1.0 + 0.1 * jax.random.normal(kg, (C2,), jnp.float32)
    beta = 0.1 * jax.random.normal(kb, (C2,), jnp.float32)
    run_mean = 0.05 * jax.random.normal(km, (C2,), jnp.float32)
    run_var = 1.0 + 0.1 * jnp.abs(jax.random.normal(kv, (C2,), jnp.float32))
    return weight, gamma, beta, run_mean, run_var


if __name__ == "__main__":
    key = jax.random.PRNGKey(0)
    kx, kp1, kp2 = jax.random.split(key, 3)

    # Test 1: module default Conv(c1=4, c2=8, k=1) -- 1x1 fast path.
    N, C1, H, W = 2, 4, 16, 16
    C2, k, s, p = 8, 1, 1, 0
    x = jax.random.normal(kx, (N, C1, H, W), dtype=jnp.float32)
    params = _make_params(kp1, C1, C2, k)

    out = conv_bn_silu_pallas(x, *params, k=k, s=s, p=p)
    out = jax.block_until_ready(out)
    ref = _reference(x, *params, k=k, s=s, p=p)
    assert out.shape == (N, C2, H, W)
    # bf16 matmul inputs + bf16 output (f32 accumulation) -> loosened tolerance.
    assert jnp.allclose(out, ref, atol=5e-2, rtol=5e-2)

    # Test 2: 3x3 conv with padding -- exercises the im2col path + K padding.
    k2, s2, p2 = 3, 1, 1
    params2 = _make_params(kp2, C1, C2, k2)
    out2 = conv_bn_silu_pallas(x, *params2, k=k2, s=s2, p=p2)
    out2 = jax.block_until_ready(out2)
    ref2 = _reference(x, *params2, k=k2, s=s2, p=p2)
    assert out2.shape == (N, C2, H, W)
    assert jnp.allclose(out2, ref2, atol=5e-2, rtol=5e-2)

    print("KERNEL_OK")
</pallas_src>

<mosaic_0001>
module attributes {stable_mosaic.version = 11 : i64} {
  func.func @_conv_bn_silu_kernel(%arg0: i32, %arg1: i32, %arg2: i32, %arg3: memref<256x128xbf16, #tpu.memory_space<vmem>>, %arg4: memref<128x128xbf16, #tpu.memory_space<vmem>>, %arg5: memref<1x128xf32, #tpu.memory_space<vmem>>, %arg6: memref<256x128xbf16, #tpu.memory_space<vmem>>, %arg7: memref<256x128xf32, #tpu.memory_space<vmem>>) attributes {dimension_semantics = [#tpu.dimension_semantics<parallel>, #tpu.dimension_semantics<parallel>, #tpu.dimension_semantics<arbitrary>], iteration_bounds = array<i64: 2, 1, 1>, scalar_prefetch = 0 : i64, scratch_operands = 1 : i64, tpu.core_type = #tpu.core_type<tc>, window_params = [{transform_indices = @transform_0, window_bounds = array<i64: 256, 128>}, {pipeline_mode = #tpu.pipeline_mode<synchronous>, transform_indices = @transform_1, window_bounds = array<i64: 128, 128>}, {transform_indices = @transform_2, window_bounds = array<i64: 1, 128>}, {transform_indices = @transform_3, window_bounds = array<i64: 256, 128>}]} {
    %c0_i32 = arith.constant 0 : i32
    %0 = arith.cmpi eq, %arg2, %c0_i32 : i32
    %1 = arith.extui %0 : i1 to i32
    %c0_i32_0 = arith.constant 0 : i32
    %2 = arith.cmpi ne, %1, %c0_i32_0 : i32
    scf.if %2 {
      %cst_10 = arith.constant 0.000000e+00 : f32
      %12 = vector.broadcast %cst_10 : f32 to vector<256x128xf32>
      %c0_11 = arith.constant 0 : index
      %c0_12 = arith.constant 0 : index
      %13 = vector.load %arg7[%c0_11, %c0_12] : memref<256x128xf32, #tpu.memory_space<vmem>>, vector<256x128xf32>
      tpu.vector_store %arg7[%c0_11, %c0_12], %12 {strides = array<i32>} : memref<256x128xf32, #tpu.memory_space<vmem>>, vector<256x128xf32>,
    } else {
    }
    %c0 = arith.constant 0 : index
    %c0_1 = arith.constant 0 : index
    %3 = vector.load %arg4[%c0, %c0_1] : memref<128x128xbf16, #tpu.memory_space<vmem>>, vector<128x128xbf16>
    %c0_2 = arith.constant 0 : index
    %c0_3 = arith.constant 0 : index
    %4 = vector.load %arg7[%c0_2, %c0_3] : memref<256x128xf32, #tpu.memory_space<vmem>>, vector<256x128xf32>
    %c0_4 = arith.constant 0 : index
    %c0_5 = arith.constant 0 : index
    %5 = vector.load %arg3[%c0_4, %c0_5] : memref<256x128xbf16, #tpu.memory_space<vmem>>, vector<256x128xbf16>
    %cst = arith.constant dense<0.000000e+00> : vector<256x128xf32>
    %6 = tpu.matmul %5, %3, %cst {dimension_numbers = #tpu.dot_dimension_numbers<[1], [0], [0], [1], [0, 0, 1, 1], [], []>} : vector<256x128xbf16>, vector<128x128xbf16>, vector<256x128xf32> -> vector<256x128xf32>
    %7 = arith.addf %4, %6 : vector<256x128xf32>
    %c0_6 = arith.constant 0 : index
    %c0_7 = arith.constant 0 : index
    %8 = vector.load %arg7[%c0_6, %c0_7] : memref<256x128xf32, #tpu.memory_space<vmem>>, vector<256x128xf32>
    tpu.vector_store %arg7[%c0_6, %c0_7], %7 {strides = array<i32>} : memref<256x128xf32, #tpu.memory_space<vmem>>, vector<256x128xf32>,
    %c0_i32_8 = arith.constant 0 : i32
    %9 = arith.cmpi eq, %arg2, %c0_i32_8 : i32
    %10 = arith.extui %9 : i1 to i32
    %c0_i32_9 = arith.constant 0 : i32
    %11 = arith.cmpi ne, %10, %c0_i32_9 : i32
    scf.if %11 {
      %c0_10 = arith.constant 0 : index
      %c0_11 = arith.constant 0 : index
      %12 = vector.load %arg7[%c0_10, %c0_11] : memref<256x128xf32, #tpu.memory_space<vmem>>, vector<256x128xf32>
      %c0_12 = arith.constant 0 : index
      %c0_13 = arith.constant 0 : index
      %13 = vector.load %arg5[%c0_12, %c0_13] : memref<1x128xf32, #tpu.memory_space<vmem>>, vector<1x128xf32>
      %14 = vector.broadcast %13 : vector<1x128xf32> to vector<256x128xf32>
      %15 = arith.addf %12, %14 : vector<256x128xf32>
      %16 = arith.negf %15 : vector<256x128xf32>
      %17 = math.exp %16 : vector<256x128xf32>
      %cst_14 = arith.constant 1.000000e+00 : f32
      %18 = vector.broadcast %cst_14 : f32 to vector<256x128xf32>
      %19 = arith.addf %18, %17 : vector<256x128xf32>
      %20 = arith.divf %18, %19 : vector<256x128xf32>
      %21 = arith.mulf %15, %20 : vector<256x128xf32>
      %22 = arith.truncf %21 : vector<256x128xf32> to vector<256x128xbf16>
      %c0_15 = arith.constant 0 : index
      %c0_16 = arith.constant 0 : index
      %23 = vector.load %arg6[%c0_15, %c0_16] : memref<256x128xbf16, #tpu.memory_space<vmem>>, vector<256x128xbf16>
      tpu.vector_store %arg6[%c0_15, %c0_16], %22 {strides = array<i32>} : memref<256x128xbf16, #tpu.memory_space<vmem>>, vector<256x128xbf16>,
    } else {
    }
    return
  }
  func.func @transform_0(%arg0: i32, %arg1: i32, %arg2: i32) -> (i32, i32) {
    %c0_i32 = arith.constant 0 : i32
    return %arg0, %arg2 : i32, i32
  }
  func.func @transform_1(%arg0: i32, %arg1: i32, %arg2: i32) -> (i32, i32) {
    %c0_i32 = arith.constant 0 : i32
    %c0_i32_0 = arith.constant 0 : i32
    %c0_i32_1 = arith.constant 0 : i32
    return %c0_i32, %c0_i32_0 : i32, i32
  }
  func.func @transform_2(%arg0: i32, %arg1: i32, %arg2: i32) -> (i32, i32) {
    %c0_i32 = arith.constant 0 : i32
    %c0_i32_0 = arith.constant 0 : i32
    return %c0_i32, %arg1 : i32, i32
  }
  func.func @transform_3(%arg0: i32, %arg1: i32, %arg2: i32) -> (i32, i32) {
    %c0_i32 = arith.constant 0 : i32
    return %arg0, %arg1 : i32, i32
  }
}

</mosaic_0001>

<llo_original>
// kernel: tpu_custom_call.1
$region0: #{tpu_custom_call.1}
  #allocation0 [shape = 'u32[]', space=smem, size = 0x4, offset = 0x4, fixed_abs, tag = 'smem constant byte address 0x4 - core index']
  #allocation1 [shape = 'u32[144,128]{1,0:T(1,128)}', space=vmem, size = 0x12000, scoped, tag = 'internal scratch']
  #allocation2 [shape = 'f32[256,128]{1,0:T(8,128)}', space=vmem, size = 0x20000, scoped, tag = 'scratch operand']
  %s0 = inlined_call_operand.hbm [shape: bf16[512,128], index: 0, kind: input, shape index: {}]
  %s1 = inlined_call_operand.hbm [shape: bf16[128,128], index: 1, kind: input, shape index: {}]
  %s2 = inlined_call_operand.vmem [shape: f32[1,128], index: 2, kind: input, shape index: {}]
  %s3 = inlined_call_operand.hbm [shape: bf16[512,128], index: 3, kind: output, shape index: {}]
  %s4 = sld [smem:[#allocation0]]
  $region61: #{tpu_custom_call.1} parent=0
    _
  %s6 = ssub.s32 1, %s4
  %s7 = scalar_select 0, %s6, %s4
  $region1: #{tpu_custom_call.1} parent=0
    #allocation3 [shape = 'u8[131072]{0}', space=vmem, size = 0x20000, scoped, tag = 'input window, operand 0']
    #allocation4 [shape = 's32[2]{0}', space=sflag, size = 0x8, scoped, tag = 'scoped memory for tpu_custom_call.1']
    #allocation5 [shape = 's32[2]{0}', space=sflag, size = 0x8, scoped, tag = 'scoped memory for tpu_custom_call.1']
    #allocation6 [shape = 'u8[32768]{0}', space=vmem, size = 0x8000, scoped, tag = 'input window, operand 1, single buffered']
    #allocation7 [shape = 's32[1]{0}', space=sflag, size = 0x4, scoped, tag = 'scoped memory for tpu_custom_call.1']
    #allocation8 [shape = 'u8[131072]{0}', space=vmem, size = 0x20000, scoped, tag = 'output window, operand 0']
    %8 = vsyncpa [#allocation4], 0
    %s9 = scalar_lea.sflag [#allocation4], 1
    %10 = vsyncpa %s9, 0
    %11 = vsyncpa [#allocation7], 0
    %12 = vsyncpa [#allocation5], 0
    %s13 = scalar_lea.sflag [#allocation5], 1
    %14 = vsyncpa %s13, 0
    loop: start=0, step=1, limit=4
    $region2: #{tpu_custom_call.1} parent=1 // loop_pre_header
      _
    $region3: #{tpu_custom_call.1} parent=1 // loop_header
      %s16 = sphi 0, %s20
      %p17 = scmp.ge.s32.totalorder %s16, 4
      %s23 = sphi 0, %s42
      %s24 = sphi 0, %s38
      %s25 = sphi 0, %s34
      %s26 = sphi 0, %s23
      %s27 = sphi 0, %s24
      %s28 = sphi 0, %s25
      %s29 = sphi 0, %s26
      %s30 = sphi 0, %s27
      %s31 = sphi 0, %s28
      %s47 = sphi 0, %s49
      %s50 = sphi 0, %s47
      %s51 = sphi 0, %s50
      %s67 = sphi 0, %s51
      %s71 = sphi 0, %s71
      %s73 = sphi 0, %s71
      %s74 = sphi 0, %s73
      %s88 = sphi 0, %s74
      %s94 = sphi 0, %s96
      %s97 = sphi 0, %s94
      %s98 = sphi 0, %s97
      %s114 = sphi 0, %s98
      %s122 = sphi 0, %s124
      %s125 = sphi 0, %s122
      %s126 = sphi 0, %s125
      %s142 = sphi 0, %s126
    $region4: #{tpu_custom_call.1} parent=1 // loop_header_branch
      %19 = sbr.rel (%p17) target = $region8
    $region5: #{tpu_custom_call.1} parent=1 // loop_body
      %s21 = ssub.s32 %s16, 1
      %s22 = ssub.s32 %s16, 2
      %s32 = sadd.s32 1, %s25
      %p33 = scmp.ge.s32.totalorder %s32, 1
      %s34 = scalar_select %p33, 0, %s32
      %s35 = sadd.s32 1, %s24
      %s36 = scalar_select %p33, %s35, %s24
      %p37 = scmp.ge.s32.totalorder %s36, 1
      %s38 = scalar_select %p37, 0, %s36
      %s39 = sadd.s32 1, %s23
      %s40 = scalar_select %p37, %s39, %s23
      %p41 = scmp.ge.s32.totalorder %s40, 2
      %s42 = scalar_select %p41, 0, %s40
      %s43 = ssub.s32 %s23, %s42
      %s44 = ssub.s32 %s25, %s34
      %s45 = sor.u32 %s43, %s44
      %p46 = scmp.eq.s32.totalorder %s45, 0
      %s48 = sadd.s32 %s47, 1
      %s49 = scalar_select %p46, %s47, %s48
      %p52 = pneg %p46
      %p53 = scmp.eq.s32.totalorder %s16, 1
      %p54 = por %p52, %p53
      %p55 = scmp.ne.s32.totalorder %s47, %s50
      %p56 = scmp.eq.s32.totalorder %s16, 0
      %p57 = por %p55, %p56
      %p58 = scmp.ne.s32.totalorder %s47, %s50
      %p59 = scmp.eq.s32.totalorder %s21, 1
      %p60 = por %p58, %p59
      %p61 = scmp.ne.s32.totalorder %s50, %s51
      %p62 = scmp.eq.s32.totalorder %s21, 0
      %p63 = por %p61, %p62
      %p64 = scmp.ne.s32.totalorder %s50, %s51
      %p65 = scmp.eq.s32.totalorder %s22, 1
      %p66 = por %p64, %p65
      %p68 = scmp.ne.s32.totalorder %s51, %s67
      %p69 = scmp.eq.s32.totalorder %s22, 0
      %p70 = por %p68, %p69
      %s72 = sadd.s32 %s71, 1
      %p75 = scmp.eq.s32.totalorder %s16, 1
      %p76 = scmp.ne.s32.totalorder %s71, %s73
      %p77 = scmp.eq.s32.totalorder %s16, 0
      %p78 = por %p76, %p77
      %p79 = scmp.ne.s32.totalorder %s71, %s73
      %p80 = scmp.eq.s32.totalorder %s21, 1
      %p81 = por %p79, %p80
      %p82 = scmp.ne.s32.totalorder %s73, %s74
      %p83 = scmp.eq.s32.totalorder %s21, 0
      %p84 = por %p82, %p83
      %p85 = scmp.ne.s32.totalorder %s73, %s74
      %p86 = scmp.eq.s32.totalorder %s22, 1
      %p87 = por %p85, %p86
      %p89 = scmp.ne.s32.totalorder %s74, %s88
      %p90 = scmp.eq.s32.totalorder %s22, 0
      %p91 = por %p89, %p90
      %s92 = ssub.s32 %s24, %s38
      %p93 = scmp.eq.s32.totalorder %s92, 0
      %s95 = sadd.s32 %s94, 1
      %s96 = scalar_select %p93, %s94, %s95
      %p99 = pneg %p93
      %p100 = scmp.eq.s32.totalorder %s16, 1
      %p101 = por %p99, %p100
      %p102 = scmp.ne.s32.totalorder %s94, %s97
      %p103 = scmp.eq.s32.totalorder %s16, 0
      %p104 = por %p102, %p103
      %p105 = scmp.ne.s32.totalorder %s94, %s97
      %p106 = scmp.eq.s32.totalorder %s21, 1
      %p107 = por %p105, %p106
      %p108 = scmp.ne.s32.totalorder %s97, %s98
      %p109 = scmp.eq.s32.totalorder %s21, 0
      %p110 = por %p108, %p109
      %p111 = scmp.ne.s32.totalorder %s97, %s98
      %p112 = scmp.eq.s32.totalorder %s22, 1
      %p113 = por %p111, %p112
      %p115 = scmp.ne.s32.totalorder %s98, %s114
      %p116 = scmp.eq.s32.totalorder %s22, 0
      %p117 = por %p115, %p116
      %s118 = ssub.s32 %s23, %s42
      %s119 = ssub.s32 %s24, %s38
      %s120 = sor.u32 %s118, %s119
      %p121 = scmp.eq.s32.totalorder %s120, 0
      %s123 = sadd.s32 %s122, 1
      %s124 = scalar_select %p121, %s122, %s123
      %p127 = pneg %p121
      %p128 = scmp.eq.s32.totalorder %s16, 1
      %p129 = por %p127, %p128
      %p130 = scmp.ne.s32.totalorder %s122, %s125
      %p131 = scmp.eq.s32.totalorder %s16, 0
      %p132 = por %p130, %p131
      %p133 = scmp.ne.s32.totalorder %s122, %s125
      %p134 = scmp.eq.s32.totalorder %s21, 1
      %p135 = por %p133, %p134
      %p136 = scmp.ne.s32.totalorder %s125, %s126
      %p137 = scmp.eq.s32.totalorder %s21, 0
      %p138 = por %p136, %p137
      %p139 = scmp.ne.s32.totalorder %s125, %s126
      %p140 = scmp.eq.s32.totalorder %s22, 1
      %p141 = por %p139, %p140
      %p143 = scmp.ne.s32.totalorder %s126, %s142
      %p144 = scmp.eq.s32.totalorder %s22, 0
      %p145 = por %p143, %p144
      %p146 = scmp.le.s32.totalorder 1, %s16
      %p147 = scmp.lt.s32.totalorder %s16, 3
      %p148 = pnand %p146, %p147
      %p149 = pneg %p148
      // Predicated region
      $region9: #{tpu_custom_call.1} parent=5 // pred_check
        _
      $region10: #{tpu_custom_call.1} parent=5 // pred_check_branch
        %151 = sbr.rel (%p148) target = $region12
      $region11: #{tpu_custom_call.1} parent=5 // pred_region
        %s152 = ssub.s32 %s16, 1
        // Predicated region
        $region13: #{tpu_custom_call.1} parent=11 // pred_check
          %p153 = pneg %p84
        $region14: #{tpu_custom_call.1} parent=11 // pred_check_branch
          %155 = sbr.rel (%p153) target = $region16
        $region15: #{tpu_custom_call.1} parent=11 // pred_region
          %s157 = ssub.s32 1024, 1024
          %158 = vsyncadd [#allocation7], %s157
          %s159 = sshll.u32 [#allocation6], 4
          %s160 = int_to_ptr.vmem [resolvable:$true] %s159
          %165 = dma.hbm_to_vmem [thread:$0]  %s1, 1024, %s160, [#allocation7], 64, 64, 4
        $region16: #{tpu_custom_call.1} parent=11 // pred_fallthru
          _
        // Predicated region
        $region17: #{tpu_custom_call.1} parent=11 // pred_check
          %p166 = pneg %p110
        $region18: #{tpu_custom_call.1} parent=11 // pred_check_branch
          %168 = sbr.rel (%p166) target = $region20
        $region19: #{tpu_custom_call.1} parent=11 // pred_region
          %p169 = scmp.lt.s32.totalorder %s27, 0
          %s170 = scalar_select %p169, %s27, 0
          %s171 = scalar_lea.vmem %s2, %s170
        $region20: #{tpu_custom_call.1} parent=11 // pred_fallthru
          _
      $region12: #{tpu_custom_call.1} parent=5 // pred_fallthru
        _
      %p172 = scmp.lt.s32.totalorder %s16, 2
      // Predicated region
      $region21: #{tpu_custom_call.1} parent=5 // pred_check
        %p173 = pneg %p172
      $region22: #{tpu_custom_call.1} parent=5 // pred_check_branch
        %175 = sbr.rel (%p173) target = $region24
      $region23: #{tpu_custom_call.1} parent=5 // pred_region
        // Predicated region
        $region25: #{tpu_custom_call.1} parent=23 // pred_check
          %p176 = pneg %p57
        $region26: #{tpu_custom_call.1} parent=23 // pred_check_branch
          %178 = sbr.rel (%p176) target = $region28
        $region27: #{tpu_custom_call.1} parent=23 // pred_region
          %s179 = sand.u32 %s47, 1
          %s180 = scalar_lea.sflag [#allocation4], %s179
          %s181 = sand.u32 %s47, 1
          %s182 = smul.addr %s181, 128
          %s183 = scalar_lea.vmem [#allocation3], %s182
          %s184 = smul.u32 32, %s23
          %s186 = ssub.s32 2048, 2048
          %187 = vsyncadd %s180, %s186
          %s188 = sadd.s32 %s25, %s184
          %s189 = smul.addr %s188, 64
          %s190 = scalar_lea.hbm %s0, %s189
          %s191 = sshll.u32 %s183, 4
          %s192 = int_to_ptr.vmem [resolvable:$true] %s191
          %197 = dma.hbm_to_vmem [thread:$0]  %s190, 2048, %s192, %s180, 64, 64, 4
        $region28: #{tpu_custom_call.1} parent=23 // pred_fallthru
          _
      $region24: #{tpu_custom_call.1} parent=5 // pred_fallthru
        _
      %p198 = scmp.le.s32.totalorder 1, %s16
      %p199 = scmp.lt.s32.totalorder %s16, 3
      %p200 = pnand %p198, %p199
      %p201 = pneg %p200
      // Predicated region
      $region29: #{tpu_custom_call.1} parent=5 // pred_check
        _
      $region30: #{tpu_custom_call.1} parent=5 // pred_check_branch
        %203 = sbr.rel (%p200) target = $region32
      $region31: #{tpu_custom_call.1} parent=5 // pred_region
        %s204 = ssub.s32 %s16, 1
        %s205 = sand.u32 %s50, 1
        %s206 = scalar_lea.sflag [#allocation4], %s205
        %s207 = sand.u32 %s50, 1
        %s208 = smul.addr %s207, 128
        %s209 = scalar_lea.vmem [#allocation3], %s208
        // Predicated region
        $region33: #{tpu_custom_call.1} parent=31 // pred_check
          %p210 = pneg %p63
        $region34: #{tpu_custom_call.1} parent=31 // pred_check_branch
          %212 = sbr.rel (%p210) target = $region36
        $region35: #{tpu_custom_call.1} parent=31 // pred_region
          %213 = dma.done %s206, 2048
        $region36: #{tpu_custom_call.1} parent=31 // pred_fallthru
          _
        // Predicated region
        $region37: #{tpu_custom_call.1} parent=31 // pred_check
          %p214 = pneg %p84
        $region38: #{tpu_custom_call.1} parent=31 // pred_check_branch
          %216 = sbr.rel (%p214) target = $region40
        $region39: #{tpu_custom_call.1} parent=31 // pred_region
          %217 = dma.done [#allocation7], 1024
        $region40: #{tpu_custom_call.1} parent=31 // pred_fallthru
          _
        %s218 = sand.u32 %s50, 1
        %s219 = scalar_lea.sflag [#allocation4], %s218
        %s220 = sand.u32 %s50, 1
        %s221 = smul.addr %s220, 128
        %s222 = scalar_lea.vmem [#allocation3], %s221
        %p223 = pneg %p63
        %p224 = pneg %p60
        %p225 = pneg %p84
        %p226 = pneg %p81
        %p227 = scmp.lt.s32.totalorder %s27, 0
        %s228 = scalar_select %p227, %s27, 0
        %s229 = scalar_lea.vmem %s2, %s228
        %p230 = pneg %p110
        %p231 = pneg %p107
        %p232 = pneg %p138
        %p233 = pneg %p135
        %s234 = sand.u32 %s125, 1
        %s235 = scalar_lea.sflag [#allocation5], %s234
        %s236 = sand.u32 %s125, 1
        %s237 = smul.addr %s236, 128
        %s238 = scalar_lea.vmem [#allocation8], %s237
        %s239 = smul.u32 32, %s26
        %p240 = scmp.lt.s32.totalorder %s27, 0
        %s241 = scalar_select %p240, %s27, 0
        %s242 = scalar_lea.vmem %s2, %s241
        %s243 = smul.u32 32, %s26
        %p245 = scmp.eq.s32.totalorder %s28, 0
        // Predicated region
        $region41: #{tpu_custom_call.1} parent=31 // pred_check
          %p246 = pneg %p245
        $region42: #{tpu_custom_call.1} parent=31 // pred_check_branch
          %248 = sbr.rel (%p246) target = $region44
        $region43: #{tpu_custom_call.1} parent=31 // pred_region
          %249 = vst [vmem:[#allocation2] sm:$0xff] 0.0
          %250 = vst [vmem:[#allocation2 + $0x8] sm:$0xff] 0.0
          %251 = vst [vmem:[#allocation2 + $0x10] sm:$0xff] 0.0
          %252 = vst [vmem:[#allocation2 + $0x18] sm:$0xff] 0.0
          %253 = vst [vmem:[#allocation2 + $0x20] sm:$0xff] 0.0
          %254 = vst [vmem:[#allocation2 + $0x28] sm:$0xff] 0.0
          %255 = vst [vmem:[#allocation2 + $0x30] sm:$0xff] 0.0
          %256 = vst [vmem:[#allocation2 + $0x38] sm:$0xff] 0.0
          %257 = vst [vmem:[#allocation2 + $0x40] sm:$0xff] 0.0
          %258 = vst [vmem:[#allocation2 + $0x48] sm:$0xff] 0.0
          %259 = vst [vmem:[#allocation2 + $0x50] sm:$0xff] 0.0
          %260 = vst [vmem:[#allocation2 + $0x58] sm:$0xff] 0.0
          %261 = vst [vmem:[#allocation2 + $0x60] sm:$0xff] 0.0
          %262 = vst [vmem:[#allocation2 + $0x68] sm:$0xff] 0.0
          %263 = vst [vmem:[#allocation2 + $0x70] sm:$0xff] 0.0
          %264 = vst [vmem:[#allocation2 + $0x78] sm:$0xff] 0.0
          %265 = vst [vmem:[#allocation2 + $0x80] sm:$0xff] 0.0
          %266 = vst [vmem:[#allocation2 + $0x88] sm:$0xff] 0.0
          %267 = vst [vmem:[#allocation2 + $0x90] sm:$0xff] 0.0
          %268 = vst [vmem:[#allocation2 + $0x98] sm:$0xff] 0.0
          %269 = vst [vmem:[#allocation2 + $0xa0] sm:$0xff] 0.0
          %270 = vst [vmem:[#allocation2 + $0xa8] sm:$0xff] 0.0
          %271 = vst [vmem:[#allocation2 + $0xb0] sm:$0xff] 0.0
          %272 = vst [vmem:[#allocation2 + $0xb8] sm:$0xff] 0.0
          %273 = vst [vmem:[#allocation2 + $0xc0] sm:$0xff] 0.0
          %274 = vst [vmem:[#allocation2 + $0xc8] sm:$0xff] 0.0
          %275 = vst [vmem:[#allocation2 + $0xd0] sm:$0xff] 0.0
          %276 = vst [vmem:[#allocation2 + $0xd8] sm:$0xff] 0.0
          %277 = vst [vmem:[#allocation2 + $0xe0] sm:$0xff] 0.0
          %278 = vst [vmem:[#allocation2 + $0xe8] sm:$0xff] 0.0
          %279 = vst [vmem:[#allocation2 + $0xf0] sm:$0xff] 0.0
          %280 = vst [vmem:[#allocation2 + $0xf8] sm:$0xff] 0.0
        $region44: #{tpu_custom_call.1} parent=31 // pred_fallthru
          _
        %v281 = vld [vmem:[#allocation6] sm:$0xf]
        %v282 = vld [vmem:[#allocation6 + $0x4] sm:$0xf]
        %v283 = vld [vmem:[#allocation6 + $0x8] sm:$0xf]
        %v284 = vld [vmem:[#allocation6 + $0xc] sm:$0xf]
        %v285 = vld [vmem:[#allocation6 + $0x10] sm:$0xf]
        %v286 = vld [vmem:[#allocation6 + $0x14] sm:$0xf]
        %v287 = vld [vmem:[#allocation6 + $0x18] sm:$0xf]
        %v288 = vld [vmem:[#allocation6 + $0x1c] sm:$0xf]
        %v289 = vld [vmem:[#allocation6 + $0x20] sm:$0xf]
        %v290 = vld [vmem:[#allocation6 + $0x24] sm:$0xf]
        %v291 = vld [vmem:[#allocation6 + $0x28] sm:$0xf]
        %v292 = vld [vmem:[#allocation6 + $0x2c] sm:$0xf]
        %v293 = vld [vmem:[#allocation6 + $0x30] sm:$0xf]
        %v294 = vld [vmem:[#allocation6 + $0x34] sm:$0xf]
        %v295 = vld [vmem:[#allocation6 + $0x38] sm:$0xf]
        %v296 = vld [vmem:[#allocation6 + $0x3c] sm:$0xf]
        %v297 = vld [vmem:[#allocation2] sm:$0xff]
        %v298 = vld [vmem:[#allocation2 + $0x8] sm:$0xff]
        %v299 = vld [vmem:[#allocation2 + $0x10] sm:$0xff]
        %v300 = vld [vmem:[#allocation2 + $0x18] sm:$0xff]
        %v301 = vld [vmem:[#allocation2 + $0x20] sm:$0xff]
        %v302 = vld [vmem:[#allocation2 + $0x28] sm:$0xff]
        %v303 = vld [vmem:[#allocation2 + $0x30] sm:$0xff]
        %v304 = vld [vmem:[#allocation2 + $0x38] sm:$0xff]
        %v305 = vld [vmem:[#allocation2 + $0x40] sm:$0xff]
        %v306 = vld [vmem:[#allocation2 + $0x48] sm:$0xff]
        %v307 = vld [vmem:[#allocation2 + $0x50] sm:$0xff]
        %v308 = vld [vmem:[#allocation2 + $0x58] sm:$0xff]
        %v309 = vld [vmem:[#allocation2 + $0x60] sm:$0xff]
        %v310 = vld [vmem:[#allocation2 + $0x68] sm:$0xff]
        %v311 = vld [vmem:[#allocation2 + $0x70] sm:$0xff]
        %v312 = vld [vmem:[#allocation2 + $0x78] sm:$0xff]
        %v313 = vld [vmem:[#allocation2 + $0x80] sm:$0xff]
        %v314 = vld [vmem:[#allocation2 + $0x88] sm:$0xff]
        %v315 = vld [vmem:[#allocation2 + $0x90] sm:$0xff]
        %v316 = vld [vmem:[#allocation2 + $0x98] sm:$0xff]
        %v317 = vld [vmem:[#allocation2 + $0xa0] sm:$0xff]
        %v318 = vld [vmem:[#allocation2 + $0xa8] sm:$0xff]
        %v319 = vld [vmem:[#allocation2 + $0xb0] sm:$0xff]
        %v320 = vld [vmem:[#allocation2 + $0xb8] sm:$0xff]
        %v321 = vld [vmem:[#allocation2 + $0xc0] sm:$0xff]
        %v322 = vld [vmem:[#allocation2 + $0xc8] sm:$0xff]
        %v323 = vld [vmem:[#allocation2 + $0xd0] sm:$0xff]
        %v324 = vld [vmem:[#allocation2 + $0xd8] sm:$0xff]
        %v325 = vld [vmem:[#allocation2 + $0xe0] sm:$0xff]
        %v326 = vld [vmem:[#allocation2 + $0xe8] sm:$0xff]
        %v327 = vld [vmem:[#allocation2 + $0xf0] sm:$0xff]
        %v328 = vld [vmem:[#allocation2 + $0xf8] sm:$0xff]
        %v329 = vld [vmem:[%s209] sm:$0xf]
        %v330 = vld [vmem:[%s209 + $0x4] sm:$0xf]
        %v331 = vld [vmem:[%s209 + $0x8] sm:$0xf]
        %v332 = vld [vmem:[%s209 + $0xc] sm:$0xf]
        %v333 = vld [vmem:[%s209 + $0x10] sm:$0xf]
        %v334 = vld [vmem:[%s209 + $0x14] sm:$0xf]
        %v335 = vld [vmem:[%s209 + $0x18] sm:$0xf]
        %v336 = vld [vmem:[%s209 + $0x1c] sm:$0xf]
        %v337 = vld [vmem:[%s209 + $0x20] sm:$0xf]
        %v338 = vld [vmem:[%s209 + $0x24] sm:$0xf]
        %v339 = vld [vmem:[%s209 + $0x28] sm:$0xf]
        %v340 = vld [vmem:[%s209 + $0x2c] sm:$0xf]
        %v341 = vld [vmem:[%s209 + $0x30] sm:$0xf]
        %v342 = vld [vmem:[%s209 + $0x34] sm:$0xf]
        %v343 = vld [vmem:[%s209 + $0x38] sm:$0xf]
        %v344 = vld [vmem:[%s209 + $0x3c] sm:$0xf]
        %v345 = vld [vmem:[%s209 + $0x40] sm:$0xf]
        %v346 = vld [vmem:[%s209 + $0x44] sm:$0xf]
        %v347 = vld [vmem:[%s209 + $0x48] sm:$0xf]
        %v348 = vld [vmem:[%s209 + $0x4c] sm:$0xf]
        %v349 = vld [vmem:[%s209 + $0x50] sm:$0xf]
        %v350 = vld [vmem:[%s209 + $0x54] sm:$0xf]
        %v351 = vld [vmem:[%s209 + $0x58] sm:$0xf]
        %v352 = vld [vmem:[%s209 + $0x5c] sm:$0xf]
        %v353 = vld [vmem:[%s209 + $0x60] sm:$0xf]
        %v354 = vld [vmem:[%s209 + $0x64] sm:$0xf]
        %v355 = vld [vmem:[%s209 + $0x68] sm:$0xf]
        %v356 = vld [vmem:[%s209 + $0x6c] sm:$0xf]
        %v357 = vld [vmem:[%s209 + $0x70] sm:$0xf]
        %v358 = vld [vmem:[%s209 + $0x74] sm:$0xf]
        %v359 = vld [vmem:[%s209 + $0x78] sm:$0xf]
        %v360 = vld [vmem:[%s209 + $0x7c] sm:$0xf]
        %v393 = vunpack.c.l.b16 %v329
        %v394 = vunpack.c.l.b16 %v330
        %v395 = vunpack.c.l.b16 %v331
        %v396 = vunpack.c.l.b16 %v332
        %v397 = vunpack.c.l.b16 %v333
        %v398 = vunpack.c.l.b16 %v334
        %v399 = vunpack.c.l.b16 %v335
        %v400 = vunpack.c.l.b16 %v336
        %v401 = vunpack.c.l.b16 %v337
        %v402 = vunpack.c.l.b16 %v338
        %v403 = vunpack.c.l.b16 %v339
        %v404 = vunpack.c.l.b16 %v340
        %v405 = vunpack.c.l.b16 %v341
        %v406 = vunpack.c.l.b16 %v342
        %v407 = vunpack.c.l.b16 %v343
        %v408 = vunpack.c.l.b16 %v344
        %v409 = vunpack.c.l.b16 %v345
        %v410 = vunpack.c.l.b16 %v346
        %v411 = vunpack.c.l.b16 %v347
        %v412 = vunpack.c.l.b16 %v348
        %v413 = vunpack.c.l.b16 %v349
        %v414 = vunpack.c.l.b16 %v350
        %v415 = vunpack.c.l.b16 %v351
        %v416 = vunpack.c.l.b16 %v352
        %v417 = vunpack.c.l.b16 %v353
        %v418 = vunpack.c.l.b16 %v354
        %v419 = vunpack.c.l.b16 %v355
        %v420 = vunpack.c.l.b16 %v356
        %v421 = vunpack.c.l.b16 %v357
        %v422 = vunpack.c.l.b16 %v358
        %v423 = vunpack.c.l.b16 %v359
        %v424 = vunpack.c.l.b16 %v360
        %v425 = vpack.c.b16 %v394, %v393
        %v426 = vpack.c.b16 %v396, %v395
        %v427 = vpack.c.b16 %v398, %v397
        %v428 = vpack.c.b16 %v400, %v399
        %v429 = vpack.c.b16 %v402, %v401
        %v430 = vpack.c.b16 %v404, %v403
        %v431 = vpack.c.b16 %v406, %v405
        %v432 = vpack.c.b16 %v408, %v407
        %v433 = vpack.c.b16 %v410, %v409
        %v434 = vpack.c.b16 %v412, %v411
        %v435 = vpack.c.b16 %v414, %v413
        %v436 = vpack.c.b16 %v416, %v415
        %v437 = vpack.c.b16 %v418, %v417
        %v438 = vpack.c.b16 %v420, %v419
        %v439 = vpack.c.b16 %v422, %v421
        %v440 = vpack.c.b16 %v424, %v423
        %v473 = vunpack.c.l.b16 %v281
        %v474 = vunpack.c.l.b16 %v282
        %v475 = vunpack.c.l.b16 %v283
        %v476 = vunpack.c.l.b16 %v284
        %v477 = vunpack.c.l.b16 %v285
        %v478 = vunpack.c.l.b16 %v286
        %v479 = vunpack.c.l.b16 %v287
        %v480 = vunpack.c.l.b16 %v288
        %v481 = vunpack.c.l.b16 %v289
        %v482 = vunpack.c.l.b16 %v290
        %v483 = vunpack.c.l.b16 %v291
        %v484 = vunpack.c.l.b16 %v292
        %v485 = vunpack.c.l.b16 %v293
        %v486 = vunpack.c.l.b16 %v294
        %v487 = vunpack.c.l.b16 %v295
        %v488 = vunpack.c.l.b16 %v296
        %v489 = vpack.c.b16 %v474, %v473
        %v490 = vpack.c.b16 %v476, %v475
        %v491 = vpack.c.b16 %v478, %v477
        %v492 = vpack.c.b16 %v480, %v479
        %v493 = vpack.c.b16 %v482, %v481
        %v494 = vpack.c.b16 %v484, %v483
        %v495 = vpack.c.b16 %v486, %v485
        %v496 = vpack.c.b16 %v488, %v487
        %505 = vmatprep.subr.bf16.mxu0 0
        %506 = vmatpush1.bf16.msra.mxu0 %v489
        %507 = vmatprep.subr.bf16.mxu0 0
        %508 = vmatpush1.bf16.msra.mxu0 %v490
        %509 = vmatprep.subr.bf16.mxu0 0
        %510 = vmatpush1.bf16.msra.mxu0 %v491
        %511 = vmatprep.subr.bf16.mxu0 0
        %512 = vmatpush1.bf16.msra.mxu0 %v492
        %513 = vmatprep.subr.bf16.mxu0 0
        %514 = vmatpush1.bf16.msra.mxu0 %v493
        %515 = vmatprep.subr.bf16.mxu0 0
        %516 = vmatpush1.bf16.msra.mxu0 %v494
        %517 = vmatprep.subr.bf16.mxu0 0
        %518 = vmatpush1.bf16.msra.mxu0 %v495
        %519 = vmatprep.subr.bf16.mxu0 0
        %520 = vmatpush1.bf16.msra.mxu0 %v496
        %521 = vmatprep.subr.bf16.mxu0 0
        %522 = vmatpush1.bf16.msra.mxu0 0
        %523 = vmatprep.subr.bf16.mxu0 0
        %524 = vmatpush1.bf16.msra.mxu0 0
        %525 = vmatprep.subr.bf16.mxu0 0
        %526 = vmatpush1.bf16.msra.mxu0 0
        %527 = vmatprep.subr.bf16.mxu0 0
        %528 = vmatpush1.bf16.msra.mxu0 0
        %529 = vmatprep.subr.bf16.mxu0 0
        %530 = vmatpush1.bf16.msra.mxu0 0
        %531 = vmatprep.subr.bf16.mxu0 0
        %532 = vmatpush1.bf16.msra.mxu0 0
        %533 = vmatprep.subr.bf16.mxu0 0
        %534 = vmatpush1.bf16.msra.mxu0 0
        %535 = vmatprep.subr.bf16.mxu0 0
        %536 = vmatpush1.bf16.msra.mxu0 0
        %537 = vmatprep.mubr.bf16.mxu0 0
        %538 = vmatmul.mubr.bf16.gmra.mrb[0].mxu0 %v425
        %v539 = vpop.f32.mrb[0].mxu0
        %v540 = vadd.f32 0.0, %v539
        %v541 = vpop.f32.mrb[0].mxu0
        %v542 = vpop.f32.mrb[0].mxu0
        %v543 = vadd.f32 0.0, %v542
        %v544 = vpop.f32.mrb[0].mxu0
        %545 = vmatprep.mubr.bf16.mxu0 0
        %546 = vmatmul.mubr.bf16.gmra.mrb[0].mxu0 %v426
        %v547 = vpop.f32.mrb[0].mxu0
        %v548 = vadd.f32 0.0, %v547
        %v549 = vpop.f32.mrb[0].mxu0
        %v550 = vpop.f32.mrb[0].mxu0
        %v551 = vadd.f32 0.0, %v550
        %v552 = vpop.f32.mrb[0].mxu0
        %553 = vmatprep.mubr.bf16.mxu0 0
        %554 = vmatmul.mubr.bf16.gmra.mrb[0].mxu0 %v427
        %v555 = vpop.f32.mrb[0].mxu0
        %v556 = vadd.f32 0.0, %v555
        %v557 = vpop.f32.mrb[0].mxu0
        %v558 = vpop.f32.mrb[0].mxu0
        %v559 = vadd.f32 0.0, %v558
        %v560 = vpop.f32.mrb[0].mxu0
        %561 = vmatprep.mubr.bf16.mxu0 0
        %562 = vmatmul.mubr.bf16.gmra.mrb[0].mxu0 %v428
        %v563 = vpop.f32.mrb[0].mxu0
        %v564 = vadd.f32 0.0, %v563
        %v565 = vpop.f32.mrb[0].mxu0
        %v566 = vpop.f32.mrb[0].mxu0
        %v567 = vadd.f32 0.0, %v566
        %v568 = vpop.f32.mrb[0].mxu0
        %569 = vmatprep.mubr.bf16.mxu0 0
        %570 = vmatmul.mubr.bf16.gmra.mrb[0].mxu0 %v429
        %v571 = vpop.f32.mrb[0].mxu0
        %v572 = vadd.f32 0.0, %v571
        %v573 = vpop.f32.mrb[0].mxu0
        %v574 = vpop.f32.mrb[0].mxu0
        %v575 = vadd.f32 0.0, %v574
        %v576 = vpop.f32.mrb[0].mxu0
        %577 = vmatprep.mubr.bf16.mxu0 0
        %578 = vmatmul.mubr.bf16.gmra.mrb[0].mxu0 %v430
        %v579 = vpop.f32.mrb[0].mxu0
        %v580 = vadd.f32 0.0, %v579
        %v581 = vpop.f32.mrb[0].mxu0
        %v582 = vpop.f32.mrb[0].mxu0
        %v583 = vadd.f32 0.0, %v582
        %v584 = vpop.f32.mrb[0].mxu0
        %585 = vmatprep.mubr.bf16.mxu0 0
        %586 = vmatmul.mubr.bf16.gmra.mrb[0].mxu0 %v431
        %v587 = vpop.f32.mrb[0].mxu0
        %v588 = vadd.f32 0.0, %v587
        %v589 = vpop.f32.mrb[0].mxu0
        %v590 = vpop.f32.mrb[0].mxu0
        %v591 = vadd.f32 0.0, %v590
        %v592 = vpop.f32.mrb[0].mxu0
        %593 = vmatprep.mubr.bf16.mxu0 0
        %594 = vmatmul.mubr.bf16.gmra.mrb[0].mxu0 %v432
        %v595 = vpop.f32.mrb[0].mxu0
        %v596 = vadd.f32 0.0, %v595
        %v597 = vpop.f32.mrb[0].mxu0
        %v598 = vpop.f32.mrb[0].mxu0
        %v599 = vadd.f32 0.0, %v598
        %v600 = vpop.f32.mrb[0].mxu0
        %601 = vmatprep.mubr.bf16.mxu0 0
        %602 = vmatmul.mubr.bf16.gmra.mrb[0].mxu0 %v433
        %v603 = vpop.f32.mrb[0].mxu0
        %v604 = vadd.f32 0.0, %v603
        %v605 = vpop.f32.mrb[0].mxu0
        %v606 = vpop.f32.mrb[0].mxu0
        %v607 = vadd.f32 0.0, %v606
        %v608 = vpop.f32.mrb[0].mxu0
        %609 = vmatprep.mubr.bf16.mxu0 0
        %610 = vmatmul.mubr.bf16.gmra.mrb[0].mxu0 %v434
        %v611 = vpop.f32.mrb[0].mxu0
        %v612 = vadd.f32 0.0, %v611
        %v613 = vpop.f32.mrb[0].mxu0
        %v614 = vpop.f32.mrb[0].mxu0
        %v615 = vadd.f32 0.0, %v614
        %v616 = vpop.f32.mrb[0].mxu0
        %617 = vmatprep.mubr.bf16.mxu0 0
        %618 = vmatmul.mubr.bf16.gmra.mrb[0].mxu0 %v435
        %v619 = vpop.f32.mrb[0].mxu0
        %v620 = vadd.f32 0.0, %v619
        %v621 = vpop.f32.mrb[0].mxu0
        %v622 = vpop.f32.mrb[0].mxu0
        %v623 = vadd.f32 0.0, %v622
        %v624 = vpop.f32.mrb[0].mxu0
        %625 = vmatprep.mubr.bf16.mxu0 0
        %626 = vmatmul.mubr.bf16.gmra.mrb[0].mxu0 %v436
        %v627 = vpop.f32.mrb[0].mxu0
        %v628 = vadd.f32 0.0, %v627
        %v629 = vpop.f32.mrb[0].mxu0
        %v630 = vpop.f32.mrb[0].mxu0
        %v631 = vadd.f32 0.0, %v630
        %v632 = vpop.f32.mrb[0].mxu0
        %633 = vmatprep.mubr.bf16.mxu0 0
        %634 = vmatmul.mubr.bf16.gmra.mrb[0].mxu0 %v437
        %v635 = vpop.f32.mrb[0].mxu0
        %v636 = vadd.f32 0.0, %v635
        %v637 = vpop.f32.mrb[0].mxu0
        %v638 = vpop.f32.mrb[0].mxu0
        %v639 = vadd.f32 0.0, %v638
        %v640 = vpop.f32.mrb[0].mxu0
        %641 = vmatprep.mubr.bf16.mxu0 0
        %642 = vmatmul.mubr.bf16.gmra.mrb[0].mxu0 %v438
        %v643 = vpop.f32.mrb[0].mxu0
        %v644 = vadd.f32 0.0, %v643
        %v645 = vpop.f32.mrb[0].mxu0
        %v646 = vpop.f32.mrb[0].mxu0
        %v647 = vadd.f32 0.0, %v646
        %v648 = vpop.f32.mrb[0].mxu0
        %649 = vmatprep.mubr.bf16.mxu0 0
        %650 = vmatmul.mubr.bf16.gmra.mrb[0].mxu0 %v439
        %v651 = vpop.f32.mrb[0].mxu0
        %v652 = vadd.f32 0.0, %v651
        %v653 = vpop.f32.mrb[0].mxu0
        %v654 = vpop.f32.mrb[0].mxu0
        %v655 = vadd.f32 0.0, %v654
        %v656 = vpop.f32.mrb[0].mxu0
        %657 = vmatprep.mubr.bf16.mxu0 0
        %658 = vmatmul.mubr.bf16.gmra.mrb[0].mxu0 %v440
        %v659 = vpop.f32.mrb[0].mxu0
        %v660 = vadd.f32 0.0, %v659
        %v661 = vpop.f32.mrb[0].mxu0
        %v662 = vpop.f32.mrb[0].mxu0
        %v663 = vadd.f32 0.0, %v662
        %v664 = vpop.f32.mrb[0].mxu0
        %665 = vdwg.mxu0
        %v666 = vadd.f32 %v297, %v540
        %v667 = vadd.f32 %v298, %v543
        %v668 = vadd.f32 %v299, %v548
        %v669 = vadd.f32 %v300, %v551
        %v670 = vadd.f32 %v301, %v556
        %v671 = vadd.f32 %v302, %v559
        %v672 = vadd.f32 %v303, %v564
        %v673 = vadd.f32 %v304, %v567
        %v674 = vadd.f32 %v305, %v572
        %v675 = vadd.f32 %v306, %v575
        %v676 = vadd.f32 %v307, %v580
        %v677 = vadd.f32 %v308, %v583
        %v678 = vadd.f32 %v309, %v588
        %v679 = vadd.f32 %v310, %v591
        %v680 = vadd.f32 %v311, %v596
        %v681 = vadd.f32 %v312, %v599
        %v682 = vadd.f32 %v313, %v604
        %v683 = vadd.f32 %v314, %v607
        %v684 = vadd.f32 %v315, %v612
        %v685 = vadd.f32 %v316, %v615
        %v686 = vadd.f32 %v317, %v620
        %v687 = vadd.f32 %v318, %v623
        %v688 = vadd.f32 %v319, %v628
        %v689 = vadd.f32 %v320, %v631
        %v690 = vadd.f32 %v321, %v636
        %v691 = vadd.f32 %v322, %v639
        %v692 = vadd.f32 %v323, %v644
        %v693 = vadd.f32 %v324, %v647
        %v694 = vadd.f32 %v325, %v652
        %v695 = vadd.f32 %v326, %v655
        %v696 = vadd.f32 %v327, %v660
        %v697 = vadd.f32 %v328, %v663
        %698 = vst [vmem:[#allocation2] sm:$0xff] %v666
        %699 = vst [vmem:[#allocation2 + $0x8] sm:$0xff] %v667
        %700 = vst [vmem:[#allocation2 + $0x10] sm:$0xff] %v668
        %701 = vst [vmem:[#allocation2 + $0x18] sm:$0xff] %v669
        %702 = vst [vmem:[#allocation2 + $0x20] sm:$0xff] %v670
        %703 = vst [vmem:[#allocation2 + $0x28] sm:$0xff] %v671
        %704 = vst [vmem:[#allocation2 + $0x30] sm:$0xff] %v672
        %705 = vst [vmem:[#allocation2 + $0x38] sm:$0xff] %v673
        %706 = vst [vmem:[#allocation2 + $0x40] sm:$0xff] %v674
        %707 = vst [vmem:[#allocation2 + $0x48] sm:$0xff] %v675
        %708 = vst [vmem:[#allocation2 + $0x50] sm:$0xff] %v676
        %709 = vst [vmem:[#allocation2 + $0x58] sm:$0xff] %v677
        %710 = vst [vmem:[#allocation2 + $0x60] sm:$0xff] %v678
        %711 = vst [vmem:[#allocation2 + $0x68] sm:$0xff] %v679
        %712 = vst [vmem:[#allocation2 + $0x70] sm:$0xff] %v680
        %713 = vst [vmem:[#allocation2 + $0x78] sm:$0xff] %v681
        %714 = vst [vmem:[#allocation2 + $0x80] sm:$0xff] %v682
        %715 = vst [vmem:[#allocation2 + $0x88] sm:$0xff] %v683
        %716 = vst [vmem:[#allocation2 + $0x90] sm:$0xff] %v684
        %717 = vst [vmem:[#allocation2 + $0x98] sm:$0xff] %v685
        %718 = vst [vmem:[#allocation2 + $0xa0] sm:$0xff] %v686
        %719 = vst [vmem:[#allocation2 + $0xa8] sm:$0xff] %v687
        %720 = vst [vmem:[#allocation2 + $0xb0] sm:$0xff] %v688
        %721 = vst [vmem:[#allocation2 + $0xb8] sm:$0xff] %v689
        %722 = vst [vmem:[#allocation2 + $0xc0] sm:$0xff] %v690
        %723 = vst [vmem:[#allocation2 + $0xc8] sm:$0xff] %v691
        %724 = vst [vmem:[#allocation2 + $0xd0] sm:$0xff] %v692
        %725 = vst [vmem:[#allocation2 + $0xd8] sm:$0xff] %v693
        %726 = vst [vmem:[#allocation2 + $0xe0] sm:$0xff] %v694
        %727 = vst [vmem:[#allocation2 + $0xe8] sm:$0xff] %v695
        %728 = vst [vmem:[#allocation2 + $0xf0] sm:$0xff] %v696
        %729 = vst [vmem:[#allocation2 + $0xf8] sm:$0xff] %v697
        // Predicated region
        $region45: #{tpu_custom_call.1} parent=31 // pred_check
          %p730 = pneg %p245
        $region46: #{tpu_custom_call.1} parent=31 // pred_check_branch
          %732 = sbr.rel (%p730) target = $region48
        $region47: #{tpu_custom_call.1} parent=31 // pred_region
          %v733 = vld [vmem:[#allocation2] sm:$0xff]
          %v734 = vld [vmem:[#allocation2 + $0x8] sm:$0xff]
          %v735 = vld [vmem:[#allocation2 + $0x10] sm:$0xff]
          %v736 = vld [vmem:[#allocation2 + $0x18] sm:$0xff]
          %v737 = vld [vmem:[#allocation2 + $0x20] sm:$0xff]
          %v738 = vld [vmem:[#allocation2 + $0x28] sm:$0xff]
          %v739 = vld [vmem:[#allocation2 + $0x30] sm:$0xff]
          %v740 = vld [vmem:[#allocation2 + $0x38] sm:$0xff]
          %v741 = vld [vmem:[#allocation2 + $0x40] sm:$0xff]
          %v742 = vld [vmem:[#allocation2 + $0x48] sm:$0xff]
          %v743 = vld [vmem:[#allocation2 + $0x50] sm:$0xff]
          %v744 = vld [vmem:[#allocation2 + $0x58] sm:$0xff]
          %v745 = vld [vmem:[#allocation2 + $0x60] sm:$0xff]
          %v746 = vld [vmem:[#allocation2 + $0x68] sm:$0xff]
          %v747 = vld [vmem:[#allocation2 + $0x70] sm:$0xff]
          %v748 = vld [vmem:[#allocation2 + $0x78] sm:$0xff]
          %v749 = vld [vmem:[#allocation2 + $0x80] sm:$0xff]
          %v750 = vld [vmem:[#allocation2 + $0x88] sm:$0xff]
          %v751 = vld [vmem:[#allocation2 + $0x90] sm:$0xff]
          %v752 = vld [vmem:[#allocation2 + $0x98] sm:$0xff]
          %v753 = vld [vmem:[#allocation2 + $0xa0] sm:$0xff]
          %v754 = vld [vmem:[#allocation2 + $0xa8] sm:$0xff]
          %v755 = vld [vmem:[#allocation2 + $0xb0] sm:$0xff]
          %v756 = vld [vmem:[#allocation2 + $0xb8] sm:$0xff]
          %v757 = vld [vmem:[#allocation2 + $0xc0] sm:$0xff]
          %v758 = vld [vmem:[#allocation2 + $0xc8] sm:$0xff]
          %v759 = vld [vmem:[#allocation2 + $0xd0] sm:$0xff]
          %v760 = vld [vmem:[#allocation2 + $0xd8] sm:$0xff]
          %v761 = vld [vmem:[#allocation2 + $0xe0] sm:$0xff]
          %v762 = vld [vmem:[#allocation2 + $0xe8] sm:$0xff]
          %v763 = vld [vmem:[#allocation2 + $0xf0] sm:$0xff]
          %v764 = vld [vmem:[#allocation2 + $0xf8] sm:$0xff]
          %v765 = vld [vmem:[%s242] sm:$0x1]
          %v767 = vlaneseq
          %v768 = vshrl.u32 %v767, 7
          %v769 = vsub.s32 0, %v768
          %v770 = vrot.slane %v765, %v769
          %v772 = vadd.f32 %v733, %v770
          %v773 = vadd.f32 %v734, %v770
          %v774 = vadd.f32 %v735, %v770
          %v775 = vadd.f32 %v736, %v770
          %v776 = vadd.f32 %v737, %v770
          %v777 = vadd.f32 %v738, %v770
          %v778 = vadd.f32 %v739, %v770
          %v779 = vadd.f32 %v740, %v770
          %v780 = vadd.f32 %v741, %v770
          %v781 = vadd.f32 %v742, %v770
          %v782 = vadd.f32 %v743, %v770
          %v783 = vadd.f32 %v744, %v770
          %v784 = vadd.f32 %v745, %v770
          %v785 = vadd.f32 %v746, %v770
          %v786 = vadd.f32 %v747, %v770
          %v787 = vadd.f32 %v748, %v770
          %v788 = vadd.f32 %v749, %v770
          %v789 = vadd.f32 %v750, %v770
          %v790 = vadd.f32 %v751, %v770
          %v791 = vadd.f32 %v752, %v770
          %v792 = vadd.f32 %v753, %v770
          %v793 = vadd.f32 %v754, %v770
          %v794 = vadd.f32 %v755, %v770
          %v795 = vadd.f32 %v756, %v770
          %v796 = vadd.f32 %v757, %v770
          %v797 = vadd.f32 %v758, %v770
          %v798 = vadd.f32 %v759, %v770
          %v799 = vadd.f32 %v760, %v770
          %v800 = vadd.f32 %v761, %v770
          %v801 = vadd.f32 %v762, %v770
          %v802 = vadd.f32 %v763, %v770
          %v803 = vadd.f32 %v764, %v770
          %v804 = vxor.u32 %v772, 2147483648
          %v805 = vxor.u32 %v773, 2147483648
          %v806 = vxor.u32 %v774, 2147483648
          %v807 = vxor.u32 %v775, 2147483648
          %v808 = vxor.u32 %v776, 2147483648
          %v809 = vxor.u32 %v777, 2147483648
          %v810 = vxor.u32 %v778, 2147483648
          %v811 = vxor.u32 %v779, 2147483648
          %v812 = vxor.u32 %v780, 2147483648
          %v813 = vxor.u32 %v781, 2147483648
          %v814 = vxor.u32 %v782, 2147483648
          %v815 = vxor.u32 %v783, 2147483648
          %v816 = vxor.u32 %v784, 2147483648
          %v817 = vxor.u32 %v785, 2147483648
          %v818 = vxor.u32 %v786, 2147483648
          %v819 = vxor.u32 %v787, 2147483648
          %v820 = vxor.u32 %v788, 2147483648
          %v821 = vxor.u32 %v789, 2147483648
          %v822 = vxor.u32 %v790, 2147483648
          %v823 = vxor.u32 %v791, 2147483648
          %v824 = vxor.u32 %v792, 2147483648
          %v825 = vxor.u32 %v793, 2147483648
          %v826 = vxor.u32 %v794, 2147483648
          %v827 = vxor.u32 %v795, 2147483648
          %v828 = vxor.u32 %v796, 2147483648
          %v829 = vxor.u32 %v797, 2147483648
          %v830 = vxor.u32 %v798, 2147483648
          %v831 = vxor.u32 %v799, 2147483648
          %v832 = vxor.u32 %v800, 2147483648
          %v833 = vxor.u32 %v801, 2147483648
          %v834 = vxor.u32 %v802, 2147483648
          %v835 = vxor.u32 %v803, 2147483648
          %v836 = vmul.f32 %v804, 1.442695
          %v837 = vpow.pop %v836
          %v838 = vmul.f32 %v805, 1.442695
          %v839 = vpow.pop %v838
          %v840 = vmul.f32 %v806, 1.442695
          %v841 = vpow.pop %v840
          %v842 = vmul.f32 %v807, 1.442695
          %v843 = vpow.pop %v842
          %v844 = vmul.f32 %v808, 1.442695
          %v845 = vpow.pop %v844
          %v846 = vmul.f32 %v809, 1.442695
          %v847 = vpow.pop %v846
          %v848 = vmul.f32 %v810, 1.442695
          %v849 = vpow.pop %v848
          %v850 = vmul.f32 %v811, 1.442695
          %v851 = vpow.pop %v850
          %v852 = vmul.f32 %v812, 1.442695
          %v853 = vpow.pop %v852
          %v854 = vmul.f32 %v813, 1.442695
          %v855 = vpow.pop %v854
          %v856 = vmul.f32 %v814, 1.442695
          %v857 = vpow.pop %v856
          %v858 = vmul.f32 %v815, 1.442695
          %v859 = vpow.pop %v858
          %v860 = vmul.f32 %v816, 1.442695
          %v861 = vpow.pop %v860
          %v862 = vmul.f32 %v817, 1.442695
          %v863 = vpow.pop %v862
          %v864 = vmul.f32 %v818, 1.442695
          %v865 = vpow.pop %v864
          %v866 = vmul.f32 %v819, 1.442695
          %v867 = vpow.pop %v866
          %v868 = vmul.f32 %v820, 1.442695
          %v869 = vpow.pop %v868
          %v870 = vmul.f32 %v821, 1.442695
          %v871 = vpow.pop %v870
          %v872 = vmul.f32 %v822, 1.442695
          %v873 = vpow.pop %v872
          %v874 = vmul.f32 %v823, 1.442695
          %v875 = vpow.pop %v874
          %v876 = vmul.f32 %v824, 1.442695
          %v877 = vpow.pop %v876
          %v878 = vmul.f32 %v825, 1.442695
          %v879 = vpow.pop %v878
          %v880 = vmul.f32 %v826, 1.442695
          %v881 = vpow.pop %v880
          %v882 = vmul.f32 %v827, 1.442695
          %v883 = vpow.pop %v882
          %v884 = vmul.f32 %v828, 1.442695
          %v885 = vpow.pop %v884
          %v886 = vmul.f32 %v829, 1.442695
          %v887 = vpow.pop %v886
          %v888 = vmul.f32 %v830, 1.442695
          %v889 = vpow.pop %v888
          %v890 = vmul.f32 %v831, 1.442695
          %v891 = vpow.pop %v890
          %v892 = vmul.f32 %v832, 1.442695
          %v893 = vpow.pop %v892
          %v894 = vmul.f32 %v833, 1.442695
          %v895 = vpow.pop %v894
          %v896 = vmul.f32 %v834, 1.442695
          %v897 = vpow.pop %v896
          %v898 = vmul.f32 %v835, 1.442695
          %v899 = vpow.pop %v898
          %v900 = vadd.f32 %v837, 1.0
          %v901 = vadd.f32 %v839, 1.0
          %v902 = vadd.f32 %v841, 1.0
          %v903 = vadd.f32 %v843, 1.0
          %v904 = vadd.f32 %v845, 1.0
          %v905 = vadd.f32 %v847, 1.0
          %v906 = vadd.f32 %v849, 1.0
          %v907 = vadd.f32 %v851, 1.0
          %v908 = vadd.f32 %v853, 1.0
          %v909 = vadd.f32 %v855, 1.0
          %v910 = vadd.f32 %v857, 1.0
          %v911 = vadd.f32 %v859, 1.0
          %v912 = vadd.f32 %v861, 1.0
          %v913 = vadd.f32 %v863, 1.0
          %v914 = vadd.f32 %v865, 1.0
          %v915 = vadd.f32 %v867, 1.0
          %v916 = vadd.f32 %v869, 1.0
          %v917 = vadd.f32 %v871, 1.0
          %v918 = vadd.f32 %v873, 1.0
          %v919 = vadd.f32 %v875, 1.0
          %v920 = vadd.f32 %v877, 1.0
          %v921 = vadd.f32 %v879, 1.0
          %v922 = vadd.f32 %v881, 1.0
          %v923 = vadd.f32 %v883, 1.0
          %v924 = vadd.f32 %v885, 1.0
          %v925 = vadd.f32 %v887, 1.0
          %v926 = vadd.f32 %v889, 1.0
          %v927 = vadd.f32 %v891, 1.0
          %v928 = vadd.f32 %v893, 1.0
          %v929 = vadd.f32 %v895, 1.0
          %v930 = vadd.f32 %v897, 1.0
          %v931 = vadd.f32 %v899, 1.0
          %v932 = vrcp.pop %v900
          %v933 = vmul.f32 1.0, %v932
          %v934 = vrcp.pop %v901
          %v935 = vmul.f32 1.0, %v934
          %v936 = vrcp.pop %v902
          %v937 = vmul.f32 1.0, %v936
          %v938 = vrcp.pop %v903
          %v939 = vmul.f32 1.0, %v938
          %v940 = vrcp.pop %v904
          %v941 = vmul.f32 1.0, %v940
          %v942 = vrcp.pop %v905
          %v943 = vmul.f32 1.0, %v942
          %v944 = vrcp.pop %v906
          %v945 = vmul.f32 1.0, %v944
          %v946 = vrcp.pop %v907
          %v947 = vmul.f32 1.0, %v946
          %v948 = vrcp.pop %v908
          %v949 = vmul.f32 1.0, %v948
          %v950 = vrcp.pop %v909
          %v951 = vmul.f32 1.0, %v950
          %v952 = vrcp.pop %v910
          %v953 = vmul.f32 1.0, %v952
          %v954 = vrcp.pop %v911
          %v955 = vmul.f32 1.0, %v954
          %v956 = vrcp.pop %v912
          %v957 = vmul.f32 1.0, %v956
          %v958 = vrcp.pop %v913
          %v959 = vmul.f32 1.0, %v958
          %v960 = vrcp.pop %v914
          %v961 = vmul.f32 1.0, %v960
          %v962 = vrcp.pop %v915
          %v963 = vmul.f32 1.0, %v962
          %v964 = vrcp.pop %v916
          %v965 = vmul.f32 1.0, %v964
          %v966 = vrcp.pop %v917
          %v967 = vmul.f32 1.0, %v966
          %v968 = vrcp.pop %v918
          %v969 = vmul.f32 1.0, %v968
          %v970 = vrcp.pop %v919
          %v971 = vmul.f32 1.0, %v970
          %v972 = vrcp.pop %v920
          %v973 = vmul.f32 1.0, %v972
          %v974 = vrcp.pop %v921
          %v975 = vmul.f32 1.0, %v974
          %v976 = vrcp.pop %v922
          %v977 = vmul.f32 1.0, %v976
          %v978 = vrcp.pop %v923
          %v979 = vmul.f32 1.0, %v978
          %v980 = vrcp.pop %v924
          %v981 = vmul.f32 1.0, %v980
          %v982 = vrcp.pop %v925
          %v983 = vmul.f32 1.0, %v982
          %v984 = vrcp.pop %v926
          %v985 = vmul.f32 1.0, %v984
          %v986 = vrcp.pop %v927
          %v987 = vmul.f32 1.0, %v986
          %v988 = vrcp.pop %v928
          %v989 = vmul.f32 1.0, %v988
          %v990 = vrcp.pop %v929
          %v991 = vmul.f32 1.0, %v990
          %v992 = vrcp.pop %v930
          %v993 = vmul.f32 1.0, %v992
          %v994 = vrcp.pop %v931
          %v995 = vmul.f32 1.0, %v994
          %v996 = vmul.f32 %v772, %v933
          %v997 = vmul.f32 %v773, %v935
          %v998 = vmul.f32 %v774, %v937
          %v999 = vmul.f32 %v775, %v939
          %v1000 = vmul.f32 %v776, %v941
          %v1001 = vmul.f32 %v777, %v943
          %v1002 = vmul.f32 %v778, %v945
          %v1003 = vmul.f32 %v779, %v947
          %v1004 = vmul.f32 %v780, %v949
          %v1005 = vmul.f32 %v781, %v951
          %v1006 = vmul.f32 %v782, %v953
          %v1007 = vmul.f32 %v783, %v955
          %v1008 = vmul.f32 %v784, %v957
          %v1009 = vmul.f32 %v785, %v959
          %v1010 = vmul.f32 %v786, %v961
          %v1011 = vmul.f32 %v787, %v963
          %v1012 = vmul.f32 %v788, %v965
          %v1013 = vmul.f32 %v789, %v967
          %v1014 = vmul.f32 %v790, %v969
          %v1015 = vmul.f32 %v791, %v971
          %v1016 = vmul.f32 %v792, %v973
          %v1017 = vmul.f32 %v793, %v975
          %v1018 = vmul.f32 %v794, %v977
          %v1019 = vmul.f32 %v795, %v979
          %v1020 = vmul.f32 %v796, %v981
          %v1021 = vmul.f32 %v797, %v983
          %v1022 = vmul.f32 %v798, %v985
          %v1023 = vmul.f32 %v799, %v987
          %v1024 = vmul.f32 %v800, %v989
          %v1025 = vmul.f32 %v801, %v991
          %v1026 = vmul.f32 %v802, %v993
          %v1027 = vmul.f32 %v803, %v995
          %v1028 = vpack.c.bf16 %v997, %v996
          %v1029 = vpack.c.bf16 %v999, %v998
          %v1030 = vpack.c.bf16 %v1001, %v1000
          %v1031 = vpack.c.bf16 %v1003, %v1002
          %v1032 = vpack.c.bf16 %v1005, %v1004
          %v1033 = vpack.c.bf16 %v1007, %v1006
          %v1034 = vpack.c.bf16 %v1009, %v1008
          %v1035 = vpack.c.bf16 %v1011, %v1010
          %v1036 = vpack.c.bf16 %v1013, %v1012
          %v1037 = vpack.c.bf16 %v1015, %v1014
          %v1038 = vpack.c.bf16 %v1017, %v1016
          %v1039 = vpack.c.bf16 %v1019, %v1018
          %v1040 = vpack.c.bf16 %v1021, %v1020
          %v1041 = vpack.c.bf16 %v1023, %v1022
          %v1042 = vpack.c.bf16 %v1025, %v1024
          %v1043 = vpack.c.bf16 %v1027, %v1026
          %v1060 = vunpack.c.l.b16 %v1028
          %v1061 = vunpack.c.h.b16 %v1028
          %v1062 = vunpack.c.l.b16 %v1029
          %v1063 = vunpack.c.h.b16 %v1029
          %v1064 = vunpack.c.l.b16 %v1030
          %v1065 = vunpack.c.h.b16 %v1030
          %v1066 = vunpack.c.l.b16 %v1031
          %v1067 = vunpack.c.h.b16 %v1031
          %v1068 = vunpack.c.l.b16 %v1032
          %v1069 = vunpack.c.h.b16 %v1032
          %v1070 = vunpack.c.l.b16 %v1033
          %v1071 = vunpack.c.h.b16 %v1033
          %v1072 = vunpack.c.l.b16 %v1034
          %v1073 = vunpack.c.h.b16 %v1034
          %v1074 = vunpack.c.l.b16 %v1035
          %v1075 = vunpack.c.h.b16 %v1035
          %v1076 = vunpack.c.l.b16 %v1036
          %v1077 = vunpack.c.h.b16 %v1036
          %v1078 = vunpack.c.l.b16 %v1037
          %v1079 = vunpack.c.h.b16 %v1037
          %v1080 = vunpack.c.l.b16 %v1038
          %v1081 = vunpack.c.h.b16 %v1038
          %v1082 = vunpack.c.l.b16 %v1039
          %v1083 = vunpack.c.h.b16 %v1039
          %v1084 = vunpack.c.l.b16 %v1040
          %v1085 = vunpack.c.h.b16 %v1040
          %v1086 = vunpack.c.l.b16 %v1041
          %v1087 = vunpack.c.h.b16 %v1041
          %v1088 = vunpack.c.l.b16 %v1042
          %v1089 = vunpack.c.h.b16 %v1042
          %v1090 = vunpack.c.l.b16 %v1043
          %v1091 = vunpack.c.h.b16 %v1043
          %v1092 = vpack.c.b16 %v1060, %v1060
          %v1093 = vpack.c.b16 %v1061, %v1061
          %v1094 = vpack.c.b16 %v1062, %v1062
          %v1095 = vpack.c.b16 %v1063, %v1063
          %v1096 = vpack.c.b16 %v1064, %v1064
          %v1097 = vpack.c.b16 %v1065, %v1065
          %v1098 = vpack.c.b16 %v1066, %v1066
          %v1099 = vpack.c.b16 %v1067, %v1067
          %v1100 = vpack.c.b16 %v1068, %v1068
          %v1101 = vpack.c.b16 %v1069, %v1069
          %v1102 = vpack.c.b16 %v1070, %v1070
          %v1103 = vpack.c.b16 %v1071, %v1071
          %v1104 = vpack.c.b16 %v1072, %v1072
          %v1105 = vpack.c.b16 %v1073, %v1073
          %v1106 = vpack.c.b16 %v1074, %v1074
          %v1107 = vpack.c.b16 %v1075, %v1075
          %v1108 = vpack.c.b16 %v1076, %v1076
          %v1109 = vpack.c.b16 %v1077, %v1077
          %v1110 = vpack.c.b16 %v1078, %v1078
          %v1111 = vpack.c.b16 %v1079, %v1079
          %v1112 = vpack.c.b16 %v1080, %v1080
          %v1113 = vpack.c.b16 %v1081, %v1081
          %v1114 = vpack.c.b16 %v1082, %v1082
          %v1115 = vpack.c.b16 %v1083, %v1083
          %v1116 = vpack.c.b16 %v1084, %v1084
          %v1117 = vpack.c.b16 %v1085, %v1085
          %v1118 = vpack.c.b16 %v1086, %v1086
          %v1119 = vpack.c.b16 %v1087, %v1087
          %v1120 = vpack.c.b16 %v1088, %v1088
          %v1121 = vpack.c.b16 %v1089, %v1089
          %v1122 = vpack.c.b16 %v1090, %v1090
          %v1123 = vpack.c.b16 %v1091, %v1091
          %1156 = vst [vmem:[%s238] sm:$0xf] %v1092
          %1157 = vst [vmem:[%s238 + $0x4] sm:$0xf] %v1093
          %1158 = vst [vmem:[%s238 + $0x8] sm:$0xf] %v1094
          %1159 = vst [vmem:[%s238 + $0xc] sm:$0xf] %v1095
          %1160 = vst [vmem:[%s238 + $0x10] sm:$0xf] %v1096
          %1161 = vst [vmem:[%s238 + $0x14] sm:$0xf] %v1097
          %1162 = vst [vmem:[%s238 + $0x18] sm:$0xf] %v1098
          %1163 = vst [vmem:[%s238 + $0x1c] sm:$0xf] %v1099
          %1164 = vst [vmem:[%s238 + $0x20] sm:$0xf] %v1100
          %1165 = vst [vmem:[%s238 + $0x24] sm:$0xf] %v1101
          %1166 = vst [vmem:[%s238 + $0x28] sm:$0xf] %v1102
          %1167 = vst [vmem:[%s238 + $0x2c] sm:$0xf] %v1103
          %1168 = vst [vmem:[%s238 + $0x30] sm:$0xf] %v1104
          %1169 = vst [vmem:[%s238 + $0x34] sm:$0xf] %v1105
          %1170 = vst [vmem:[%s238 + $0x38] sm:$0xf] %v1106
          %1171 = vst [vmem:[%s238 + $0x3c] sm:$0xf] %v1107
          %1172 = vst [vmem:[%s238 + $0x40] sm:$0xf] %v1108
          %1173 = vst [vmem:[%s238 + $0x44] sm:$0xf] %v1109
          %1174 = vst [vmem:[%s238 + $0x48] sm:$0xf] %v1110
          %1175 = vst [vmem:[%s238 + $0x4c] sm:$0xf] %v1111
          %1176 = vst [vmem:[%s238 + $0x50] sm:$0xf] %v1112
          %1177 = vst [vmem:[%s238 + $0x54] sm:$0xf] %v1113
          %1178 = vst [vmem:[%s238 + $0x58] sm:$0xf] %v1114
          %1179 = vst [vmem:[%s238 + $0x5c] sm:$0xf] %v1115
          %1180 = vst [vmem:[%s238 + $0x60] sm:$0xf] %v1116
          %1181 = vst [vmem:[%s238 + $0x64] sm:$0xf] %v1117
          %1182 = vst [vmem:[%s238 + $0x68] sm:$0xf] %v1118
          %1183 = vst [vmem:[%s238 + $0x6c] sm:$0xf] %v1119
          %1184 = vst [vmem:[%s238 + $0x70] sm:$0xf] %v1120
          %1185 = vst [vmem:[%s238 + $0x74] sm:$0xf] %v1121
          %1186 = vst [vmem:[%s238 + $0x78] sm:$0xf] %v1122
          %1187 = vst [vmem:[%s238 + $0x7c] sm:$0xf] %v1123
        $region48: #{tpu_custom_call.1} parent=31 // pred_fallthru
          _
        %s1188 = sand.u32 %s125, 1
        %s1189 = scalar_lea.sflag [#allocation5], %s1188
        %s1190 = sand.u32 %s125, 1
        %s1191 = smul.addr %s1190, 128
        %s1192 = scalar_lea.vmem [#allocation8], %s1191
        // Predicated region
        $region49: #{tpu_custom_call.1} parent=31 // pred_check
          %p1193 = pneg %p135
        $region50: #{tpu_custom_call.1} parent=31 // pred_check_branch
          %1195 = sbr.rel (%p1193) target = $region52
        $region51: #{tpu_custom_call.1} parent=31 // pred_region
          %s1196 = smul.u32 32, %s26
          %s1198 = ssub.s32 2048, 2048
          %1199 = vsyncadd %s1189, %s1198
          %s1200 = sadd.s32 %s27, %s1196
          %s1201 = smul.addr %s1200, 64
          %s1202 = scalar_lea.hbm %s3, %s1201
          %s1203 = sshll.u32 %s1192, 4
          %s1204 = int_to_ptr.vmem [resolvable:$true] %s1203
          %1209 = dma.vmem_to_hbm [thread:$0]  %s1204, 2048, %s1202, %s1189, 64, 64, 4
        $region52: #{tpu_custom_call.1} parent=31 // pred_fallthru
          _
      $region32: #{tpu_custom_call.1} parent=5 // pred_fallthru
        _
      %p1210 = scmp.le.s32.totalorder 2, %s16
      // Predicated region
      $region53: #{tpu_custom_call.1} parent=5 // pred_check
        %p1211 = pneg %p1210
      $region54: #{tpu_custom_call.1} parent=5 // pred_check_branch
        %1213 = sbr.rel (%p1211) target = $region56
      $region55: #{tpu_custom_call.1} parent=5 // pred_region
        %s1214 = ssub.s32 %s16, 2
        // Predicated region
        $region57: #{tpu_custom_call.1} parent=55 // pred_check
          %p1215 = pneg %p141
        $region58: #{tpu_custom_call.1} parent=55 // pred_check_branch
          %1217 = sbr.rel (%p1215) target = $region60
        $region59: #{tpu_custom_call.1} parent=55 // pred_region
          %s1218 = sand.u32 %s126, 1
          %s1219 = scalar_lea.sflag [#allocation5], %s1218
          %s1220 = sand.u32 %s126, 1
          %s1221 = smul.addr %s1220, 128
          %s1222 = scalar_lea.vmem [#allocation8], %s1221
          %1223 = dma.done %s1219, 2048
        $region60: #{tpu_custom_call.1} parent=55 // pred_fallthru
          _
      $region56: #{tpu_custom_call.1} parent=5 // pred_fallthru
        _
    $region6: #{tpu_custom_call.1} parent=1 // loop_footer
      %s20 = sadd.s32 1, %s16
    $region7: #{tpu_custom_call.1} parent=1 // loop_footer_branch
      %15 = sbr.rel target = $region3
    $region8: #{tpu_custom_call.1} parent=1 // loop_exit
      _
    %1224 = vsyncpa [#allocation4], 1
    %s1225 = scalar_lea.sflag [#allocation4], 1
    %1226 = vsyncpa %s1225, 1
    %1227 = vsyncpa [#allocation7], 1
    %1228 = vsyncpa [#allocation5], 1
    %s1229 = scalar_lea.sflag [#allocation5], 1
    %1230 = vsyncpa %s1229, 1

</llo_original>
